<compile_context>
chip_gen: v6e
topology: v6e:2x2x1
jax: 0.10.0
libtpu: 0.0.40
codegen_flags: <defaults>
</compile_context>

<pallas_src>
import math

import jax
import jax.numpy as jnp
from jax.experimental import pallas as pl
from jax.experimental.pallas import tpu as pltpu

PATCH = 4            # synthetic backbone patch size (spatial downsample factor)
NUM_CLASSES = 16
BN_EPS = 1e-5        # nn.BatchNorm2d default eps


# ---------------------------------------------------------------------------
# Parameter init (deterministic, mirrors init_layer / init_bn semantics)
# ---------------------------------------------------------------------------
def xavier_uniform(key, shape, fan_in, fan_out):
    limit = math.sqrt(6.0 / (fan_in + fan_out))
    return jax.random.uniform(key, shape, jnp.float32, minval=-limit, maxval=limit)


def init_model_params(key, num_features, num_classes, patch=PATCH):
    """One BirdClefSEDAttModel's parameters (synthetic backbone stem + SED head)."""
    k_patch, k_fc, k_att, k_cla = jax.random.split(key, 4)
    K = patch * patch
    C = num_features
    return {
        # synthetic backbone stem (stand-in for timm forward_features)
        "w_patch": xavier_uniform(k_patch, (K, C), K, C),
        "b_patch": jnp.zeros((C,), jnp.float32),
        # fc1 = nn.Linear(C, C): xavier_uniform weight (out, in), zero bias
        "w_fc1": xavier_uniform(k_fc, (C, C), C, C),
        "b_fc1": jnp.zeros((C,), jnp.float32),
        # AttBlockV2 1x1 Conv1d att / cla: xavier_uniform weight, zero bias
        "w_att": xavier_uniform(k_att, (num_classes, C), C, num_classes),
        "b_att": jnp.zeros((num_classes,), jnp.float32),
        "w_cla": xavier_uniform(k_cla, (num_classes, C), C, num_classes),
        "b_cla": jnp.zeros((num_classes,), jnp.float32),
    }


def build_fused_params(params1, params2, num_classes=NUM_CLASSES):
    """Pack both sub-models into one lane-dense weight set (done once).

    Lane layout of the packed channel axis (C2 = 2*c_pad = 128):
        [0 : c1]                -> model1 channels
        [c_pad : c_pad + c2]    -> model2 channels
        everything else         -> zero padding (provably inert, see kernel)
    TODO(synk): real checkpoints carry trained BatchNorm running statistics;
    with default init stats bn0(eval) is a pure 1/sqrt(1+eps) scale, folded
    into the stem weight here.
    """
    bn_scale = 1.0 / math.sqrt(1.0 + BN_EPS)
    c1 = params1["w_fc1"].shape[0]
    c2 = params2["w_fc1"].shape[0]
    c_pad = max(c1, c2)
    C2 = 2 * c_pad
    NC = num_classes
    K = params1["w_patch"].shape[0]

    def pad_cols(a, width):
        return jnp.pad(a, ((0, 0), (0, width - a.shape[1])))

    def pad_vec(v, width):
        return jnp.pad(v, (0, width - v.shape[0]))

    # stem weight/bias, bn0 folded into the weight
    w_patch = jnp.concatenate(
        [pad_cols(bn_scale * params1["w_patch"], c_pad),
         pad_cols(bn_scale * params2["w_patch"], c_pad)], axis=1)        # (K, C2)
    b_patch = jnp.concatenate(
        [pad_vec(params1["b_patch"], c_pad),
         pad_vec(params2["b_patch"], c_pad)])[None, :]                   # (1, C2)

    # fc1 of both models as one block-diagonal matmul, stored transposed (in,out)
    w_fc_t = jnp.zeros((C2, C2), jnp.float32)
    w_fc_t = w_fc_t.at[:c1, :c1].set(params1["w_fc1"].T)
    w_fc_t = w_fc_t.at[c_pad:c_pad + c2, c_pad:c_pad + c2].set(params2["w_fc1"].T)
    b_fc = jnp.concatenate(
        [pad_vec(params1["b_fc1"], c_pad),
         pad_vec(params2["b_fc1"], c_pad)])[None, :]                     # (1, C2)

    # att/cla 1x1 convs of both models fused into one (C2, 4*NC) projection,
    # stored transposed; column blocks = [att1 | att2 | cla1 | cla2]
    w_proj_t = jnp.zeros((C2, 4 * NC), jnp.float32)
    w_proj_t = w_proj_t.at[:c1, 0:NC].set(params1["w_att"].T)
    w_proj_t = w_proj_t.at[c_pad:c_pad + c2, NC:2 * NC].set(params2["w_att"].T)
    w_proj_t = w_proj_t.at[:c1, 2 * NC:3 * NC].set(params1["w_cla"].T)
    w_proj_t = w_proj_t.at[c_pad:c_pad + c2, 3 * NC:4 * NC].set(params2["w_cla"].T)
    b_proj = jnp.concatenate(
        [params1["b_att"], params2["b_att"],
         params1["b_cla"], params2["b_cla"]])[None, :]                   # (1, 4*NC)

    return {
        "w_patch": w_patch, "b_patch": b_patch,
        "w_fc_t": w_fc_t, "b_fc": b_fc,
        "w_proj_t": w_proj_t, "b_proj": b_proj,
        "c_pad": c_pad,
    }


# ---------------------------------------------------------------------------
# Single fused Pallas kernel: stem + SED head (both sub-models) + ensemble
# ---------------------------------------------------------------------------
def teacher_fused_forward(x, fused, num_classes=NUM_CLASSES, patch=PATCH):
    """x: (B, 1, T, F) float32. Returns ensemble prediction (B, num_classes)."""
    B, _, T, F = x.shape
    Hp, Wp = F // patch, T // patch      # feature-map freq / time extents
    K = patch * patch
    G = B * Wp                           # total time frames across the batch
    NC = num_classes
    c_pad = fused["c_pad"]
    C2 = 2 * c_pad                       # packed channel width (both sub-models)

    # Patch extraction (pure layout, cheap XLA ops fused under jit).
    # TODO(synk): the real timm backbones (eca_nfnet_l0 / tf_efficientnetv2_b3)
    # and their pretrained .pt checkpoints cannot be reproduced here; this
    # deterministic patch-embed stand-in keeps the (B, C, F', T') interface the
    # SED head expects.
    xb = jnp.transpose(x, (0, 1, 3, 2))                  # (B, 1, F, T) NCHW
    p = xb.reshape(B, 1, Hp, patch, Wp, patch)
    p = jnp.transpose(p, (2, 0, 4, 1, 3, 5))             # (Hp, B, Wp, 1, pf, pt)
    patches = p.reshape(Hp * G, K)                       # freq-major row blocks

    def kernel(p_ref, wp_ref, bp_ref, wfc_ref, bfc_ref, wpr_ref, bpr_ref, o_ref):
        # --- synthetic backbone stem for BOTH sub-models at once (bn0 folded)
        emb = jnp.maximum(
            jnp.dot(p_ref[...], wp_ref[...], preferred_element_type=jnp.float32)
            + bp_ref[...], 0.0)                          # (Hp*G, C2)

        # mean over the frequency axis: Hp contiguous (G, C2) slabs
        xacc = emb[0:G, :]
        for h in range(1, Hp):                           # tiny static unroll
            xacc = xacc + emb[h * G:(h + 1) * G, :]
        xt = xacc * (1.0 / Hp)                           # (G, C2), rows = (b, t)

        # max/avg pool1d(k=3, s=1, p=1) along time via one-row sublane shifts;
        # boundary masks also kill the (meaningless) cross-batch wrap rows.
        zrow = jnp.zeros((1, C2), jnp.float32)
        x_prev = jnp.concatenate([zrow, xt[:-1, :]], axis=0)     # row t <- t-1
        x_next = jnp.concatenate([xt[1:, :], zrow], axis=0)      # row t <- t+1
        t_idx = jax.lax.broadcasted_iota(jnp.int32, (G, C2), 0) % Wp
        first = t_idx == 0
        last = t_idx == Wp - 1
        # F.max_pool1d: implicit padding acts like -inf
        x1 = jnp.maximum(xt, jnp.maximum(jnp.where(first, -jnp.inf, x_prev),
                                         jnp.where(last, -jnp.inf, x_next)))
        # F.avg_pool1d (count_include_pad=True): zero pad, /3
        x2 = (xt + jnp.where(first, 0.0, x_prev)
              + jnp.where(last, 0.0, x_next)) * (1.0 / 3.0)
        xs = x1 + x2                                     # (G, C2)

        # fc1 (+ReLU) of both models: block-diagonal weight, lanes = channels
        # (dropout is identity in eval)
        y = jnp.maximum(
            jnp.dot(xs, wfc_ref[...], preferred_element_type=jnp.float32)
            + bfc_ref[...], 0.0)                         # (G, C2)

        # fused AttBlockV2 1x1 convs: columns = [att1 | att2 | cla1 | cla2]
        z = (jnp.dot(y, wpr_ref[...], preferred_element_type=jnp.float32)
             + bpr_ref[...])                             # (G, 4*NC)
        att = jnp.tanh(z[:, :2 * NC])                    # (G, 2*NC)
        cla = jax.nn.sigmoid(z[:, 2 * NC:])              # (G, 2*NC)

        # per-batch softmax over time, clipwise/maxframewise, 0.3/0.7 ensemble
        preds = []
        for b in range(B):                               # tiny static unroll
            a_b = att[b * Wp:(b + 1) * Wp, :]            # (Wp, 2*NC)
            c_b = cla[b * Wp:(b + 1) * Wp, :]
            m = jnp.max(a_b, axis=0, keepdims=True)
            e = jnp.exp(a_b - m)
            norm_att = e * pl.reciprocal(jnp.sum(e, axis=0, keepdims=True),
                                         approx=True)
            clip = jnp.sum(norm_att * c_b, axis=0, keepdims=True)   # clipwise
            maxframe = jnp.max(c_b, axis=0, keepdims=True)          # maxframewise
            pred_b = 0.5 * (clip + maxframe)             # (1, 2*NC): [model1|model2]
            preds.append(0.3 * pred_b[:, :NC] + 0.7 * pred_b[:, NC:])
        o_ref[...] = jnp.concatenate(preds, axis=0)      # (B, NC), lane-dense

    return pl.pallas_call(
        kernel,
        out_shape=jax.ShapeDtypeStruct((B, NC), jnp.float32),
        grid_spec=pltpu.PrefetchScalarGridSpec(
            num_scalar_prefetch=0,
            grid=(1,),                                   # whole batch, one step
            in_specs=[
                pl.BlockSpec((Hp * G, K), lambda i: (0, 0)),
                pl.BlockSpec((K, C2), lambda i: (0, 0)),
                pl.BlockSpec((1, C2), lambda i: (0, 0)),
                pl.BlockSpec((C2, C2), lambda i: (0, 0)),
                pl.BlockSpec((1, C2), lambda i: (0, 0)),
                pl.BlockSpec((C2, 4 * NC), lambda i: (0, 0)),
                pl.BlockSpec((1, 4 * NC), lambda i: (0, 0)),
            ],
            out_specs=pl.BlockSpec((B, NC), lambda i: (0, 0)),
        ),
        compiler_params=pltpu.CompilerParams(
            dimension_semantics=("arbitrary",)),         # do not shard trivial work
    )(patches, fused["w_patch"], fused["b_patch"], fused["w_fc_t"],
      fused["b_fc"], fused["w_proj_t"], fused["b_proj"])


def teacher_forward(x, fused):
    pred = teacher_fused_forward(x, fused)
    return pred, pred


# ---------------------------------------------------------------------------
# Pure-JAX reference of the same (synthetic-backbone) forward, for validation
# ---------------------------------------------------------------------------
def reference_forward(x, params1, params2, patch=PATCH):
    bn_scale = 1.0 / math.sqrt(1.0 + BN_EPS)

    def one_model(prm):
        B, _, T, F = x.shape
        Hp, Wp = F // patch, T // patch
        xb = jnp.transpose(x, (0, 1, 3, 2))
        pt = xb.reshape(B, 1, Hp, patch, Wp, patch)
        pt = jnp.transpose(pt, (0, 2, 4, 1, 3, 5)).reshape(B, Hp * Wp, patch * patch)
        emb = jax.nn.relu((bn_scale * pt) @ prm["w_patch"]
                          + prm["b_patch"][None, None, :])          # (B, N, C)
        C = prm["w_patch"].shape[1]
        xm = emb.reshape(B, Hp, Wp, C).mean(axis=1)                  # (B, T', C)
        xm = jnp.transpose(xm, (0, 2, 1))                            # (B, C, T')
        xinf = jnp.pad(xm, ((0, 0), (0, 0), (1, 1)), constant_values=-jnp.inf)
        x1 = jnp.maximum(jnp.maximum(xinf[..., :-2], xinf[..., 1:-1]), xinf[..., 2:])
        xz = jnp.pad(xm, ((0, 0), (0, 0), (1, 1)))
        x2 = (xz[..., :-2] + xz[..., 1:-1] + xz[..., 2:]) / 3.0
        xs = x1 + x2
        y = jax.nn.relu(jnp.einsum("oc,bct->bot", prm["w_fc1"], xs)
                        + prm["b_fc1"][None, :, None])
        att = jnp.tanh(jnp.einsum("nc,bct->bnt", prm["w_att"], y)
                       + prm["b_att"][None, :, None])
        norm_att = jax.nn.softmax(att, axis=-1)
        cla = jax.nn.sigmoid(jnp.einsum("nc,bct->bnt", prm["w_cla"], y)
                             + prm["b_cla"][None, :, None])
        clip = jnp.sum(norm_att * cla, axis=-1)
        maxframe = jnp.max(cla, axis=-1)
        return 0.5 * (clip + maxframe)

    return 0.3 * one_model(params1) + 0.7 * one_model(params2)


if __name__ == "__main__":
    key = jax.random.PRNGKey(0)
    kx, k1, k2 = jax.random.split(key, 3)

    B, T, F = 2, 16, 16
    x = jax.random.normal(kx, (B, 1, T, F), jnp.float32)

    # two "teacher" sub-models with different feature widths (stand-ins for the
    # two timm backbones' num_features)
    params1 = init_model_params(k1, num_features=64, num_classes=NUM_CLASSES)
    params2 = init_model_params(k2, num_features=48, num_classes=NUM_CLASSES)
    fused = build_fused_params(params1, params2, NUM_CLASSES)   # one-time packing

    fwd = jax.jit(lambda inp: teacher_forward(inp, fused))
    pred, pred_again = fwd(x)
    jax.block_until_ready(pred)

    assert pred.shape == (B, NUM_CLASSES), pred.shape
    assert pred.dtype == jnp.float32
    assert bool(jnp.all(jnp.isfinite(pred)))

    ref = reference_forward(x, params1, params2)
    assert bool(jnp.allclose(pred, ref, atol=1e-2, rtol=1e-2)), (
        jnp.max(jnp.abs(pred - ref)))
    print("KERNEL_OK")
</pallas_src>

<mosaic_0001>
module attributes {stable_mosaic.version = 11 : i64} {
  func.func @kernel(%arg0: i32, %arg1: memref<32x16xf32, #tpu.memory_space<vmem>>, %arg2: memref<16x128xf32, #tpu.memory_space<vmem>>, %arg3: memref<1x128xf32, #tpu.memory_space<vmem>>, %arg4: memref<128x128xf32, #tpu.memory_space<vmem>>, %arg5: memref<1x128xf32, #tpu.memory_space<vmem>>, %arg6: memref<128x64xf32, #tpu.memory_space<vmem>>, %arg7: memref<1x64xf32, #tpu.memory_space<vmem>>, %arg8: memref<2x16xf32, #tpu.memory_space<vmem>>) attributes {dimension_semantics = [#tpu.dimension_semantics<arbitrary>], iteration_bounds = array<i64: 1>, scalar_prefetch = 0 : i64, scratch_operands = 0 : i64, tpu.core_type = #tpu.core_type<tc>, window_params = [{pipeline_mode = #tpu.pipeline_mode<synchronous>, transform_indices = @transform_0, window_bounds = array<i64: 32, 16>}, {pipeline_mode = #tpu.pipeline_mode<synchronous>, transform_indices = @transform_1, window_bounds = array<i64: 16, 128>}, {pipeline_mode = #tpu.pipeline_mode<synchronous>, transform_indices = @transform_2, window_bounds = array<i64: 1, 128>}, {pipeline_mode = #tpu.pipeline_mode<synchronous>, transform_indices = @transform_3, window_bounds = array<i64: 128, 128>}, {pipeline_mode = #tpu.pipeline_mode<synchronous>, transform_indices = @transform_4, window_bounds = array<i64: 1, 128>}, {pipeline_mode = #tpu.pipeline_mode<synchronous>, transform_indices = @transform_5, window_bounds = array<i64: 128, 64>}, {pipeline_mode = #tpu.pipeline_mode<synchronous>, transform_indices = @transform_6, window_bounds = array<i64: 1, 64>}, {pipeline_mode = #tpu.pipeline_mode<synchronous>, transform_indices = @transform_7, window_bounds = array<i64: 2, 16>}]} {
    %c0 = arith.constant 0 : index
    %c0_0 = arith.constant 0 : index
    %0 = vector.load %arg1[%c0, %c0_0] : memref<32x16xf32, #tpu.memory_space<vmem>>, vector<32x16xf32>
    %c0_1 = arith.constant 0 : index
    %c0_2 = arith.constant 0 : index
    %1 = vector.load %arg2[%c0_1, %c0_2] : memref<16x128xf32, #tpu.memory_space<vmem>>, vector<16x128xf32>
    %cst = arith.constant dense<0.000000e+00> : vector<32x128xf32>
    %2 = tpu.matmul %0, %1, %cst {dimension_numbers = #tpu.dot_dimension_numbers<[1], [0], [0], [1], [0, 0, 1, 1], [], []>} : vector<32x16xf32>, vector<16x128xf32>, vector<32x128xf32> -> vector<32x128xf32>
    %c0_3 = arith.constant 0 : index
    %c0_4 = arith.constant 0 : index
    %3 = vector.load %arg3[%c0_3, %c0_4] : memref<1x128xf32, #tpu.memory_space<vmem>>, vector<1x128xf32>
    %4 = vector.broadcast %3 : vector<1x128xf32> to vector<32x128xf32>
    %5 = arith.addf %2, %4 : vector<32x128xf32>
    %cst_5 = arith.constant 0.000000e+00 : f32
    %6 = vector.broadcast %cst_5 : f32 to vector<32x128xf32>
    %7 = arith.maximumf %5, %6 : vector<32x128xf32>
    %8 = vector.extract_strided_slice %7 {offsets = [0, 0], sizes = [8, 128], strides = [1, 1]} : vector<32x128xf32> to vector<8x128xf32>
    %9 = vector.extract_strided_slice %7 {offsets = [8, 0], sizes = [8, 128], strides = [1, 1]} : vector<32x128xf32> to vector<8x128xf32>
    %10 = arith.addf %8, %9 : vector<8x128xf32>
    %11 = vector.extract_strided_slice %7 {offsets = [16, 0], sizes = [8, 128], strides = [1, 1]} : vector<32x128xf32> to vector<8x128xf32>
    %12 = arith.addf %10, %11 : vector<8x128xf32>
    %13 = vector.extract_strided_slice %7 {offsets = [24, 0], sizes = [8, 128], strides = [1, 1]} : vector<32x128xf32> to vector<8x128xf32>
    %14 = arith.addf %12, %13 : vector<8x128xf32>
    %cst_6 = arith.constant 2.500000e-01 : f32
    %15 = vector.broadcast %cst_6 : f32 to vector<8x128xf32>
    %16 = arith.mulf %14, %15 : vector<8x128xf32>
    %cst_7 = arith.constant 0.000000e+00 : f32
    %17 = vector.broadcast %cst_7 : f32 to vector<1x128xf32>
    %18 = vector.extract_strided_slice %16 {offsets = [0, 0], sizes = [7, 128], strides = [1, 1]} : vector<8x128xf32> to vector<7x128xf32>
    %19 = tpu.concatenate %17, %18 in 0 : vector<1x128xf32>, vector<7x128xf32> -> vector<8x128xf32>
    %20 = vector.extract_strided_slice %16 {offsets = [1, 0], sizes = [7, 128], strides = [1, 1]} : vector<8x128xf32> to vector<7x128xf32>
    %21 = tpu.concatenate %20, %17 in 0 : vector<7x128xf32>, vector<1x128xf32> -> vector<8x128xf32>
    %22 = tpu.iota {dimensions = array<i32: 0>} : vector<8x128xi32>
    %c4_i32 = arith.constant 4 : i32
    %c0_i32 = arith.constant 0 : i32
    %23 = arith.cmpi eq, %c4_i32, %c0_i32 : i32
    %c1_i32 = arith.constant 1 : i32
    %24 = arith.select %23, %c1_i32, %c4_i32 : i32
    %25 = vector.broadcast %24 : i32 to vector<8x128xi32>
    %26 = arith.remsi %22, %25 : vector<8x128xi32>
    %c0_i32_8 = arith.constant 0 : i32
    %27 = vector.broadcast %c0_i32_8 : i32 to vector<8x128xi32>
    %28 = arith.cmpi ne, %26, %27 : vector<8x128xi32>
    %c0_i32_9 = arith.constant 0 : i32
    %29 = vector.broadcast %c0_i32_9 : i32 to vector<8x128xi32>
    %30 = arith.cmpi slt, %26, %29 : vector<8x128xi32>
    %c0_i32_10 = arith.constant 0 : i32
    %31 = arith.cmpi slt, %24, %c0_i32_10 : i32
    %32 = vector.broadcast %31 : i1 to vector<8x128xi1>
    %33 = vector.broadcast %32 : vector<8x128xi1> to vector<8x128xi1>
    %34 = arith.xori %30, %33 : vector<8x128xi1>
    %35 = arith.andi %34, %28 : vector<8x128xi1>
    %36 = vector.broadcast %24 : i32 to vector<8x128xi32>
    %37 = arith.addi %26, %36 : vector<8x128xi32>
    %38 = arith.select %35, %37, %26 : vector<8x128xi1>, vector<8x128xi32>
    %c0_i32_11 = arith.constant 0 : i32
    %39 = vector.broadcast %c0_i32_11 : i32 to vector<8x128xi32>
    %40 = arith.cmpi eq, %38, %39 : vector<8x128xi32>
    %c3_i32 = arith.constant 3 : i32
    %41 = vector.broadcast %c3_i32 : i32 to vector<8x128xi32>
    %42 = arith.cmpi eq, %38, %41 : vector<8x128xi32>
    %cst_12 = arith.constant 0xFF800000 : f32
    %43 = vector.broadcast %cst_12 : f32 to vector<8x128xf32>
    %44 = arith.select %40, %43, %19 : vector<8x128xi1>, vector<8x128xf32>
    %cst_13 = arith.constant 0xFF800000 : f32
    %45 = vector.broadcast %cst_13 : f32 to vector<8x128xf32>
    %46 = arith.select %42, %45, %21 : vector<8x128xi1>, vector<8x128xf32>
    %47 = arith.maximumf %44, %46 : vector<8x128xf32>
    %48 = arith.maximumf %16, %47 : vector<8x128xf32>
    %cst_14 = arith.constant 0.000000e+00 : f32
    %49 = vector.broadcast %cst_14 : f32 to vector<8x128xf32>
    %50 = arith.select %40, %49, %19 : vector<8x128xi1>, vector<8x128xf32>
    %51 = arith.addf %16, %50 : vector<8x128xf32>
    %cst_15 = arith.constant 0.000000e+00 : f32
    %52 = vector.broadcast %cst_15 : f32 to vector<8x128xf32>
    %53 = arith.select %42, %52, %21 : vector<8x128xi1>, vector<8x128xf32>
    %54 = arith.addf %51, %53 : vector<8x128xf32>
    %cst_16 = arith.constant 0.333333343 : f32
    %55 = vector.broadcast %cst_16 : f32 to vector<8x128xf32>
    %56 = arith.mulf %54, %55 : vector<8x128xf32>
    %57 = arith.addf %48, %56 : vector<8x128xf32>
    %c0_17 = arith.constant 0 : index
    %c0_18 = arith.constant 0 : index
    %58 = vector.load %arg4[%c0_17, %c0_18] : memref<128x128xf32, #tpu.memory_space<vmem>>, vector<128x128xf32>
    %cst_19 = arith.constant dense<0.000000e+00> : vector<8x128xf32>
    %59 = tpu.matmul %57, %58, %cst_19 {dimension_numbers = #tpu.dot_dimension_numbers<[1], [0], [0], [1], [0, 0, 1, 1], [], []>} : vector<8x128xf32>, vector<128x128xf32>, vector<8x128xf32> -> vector<8x128xf32>
    %c0_20 = arith.constant 0 : index
    %c0_21 = arith.constant 0 : index
    %60 = vector.load %arg5[%c0_20, %c0_21] : memref<1x128xf32, #tpu.memory_space<vmem>>, vector<1x128xf32>
    %61 = vector.broadcast %60 : vector<1x128xf32> to vector<8x128xf32>
    %62 = arith.addf %59, %61 : vector<8x128xf32>
    %cst_22 = arith.constant 0.000000e+00 : f32
    %63 = vector.broadcast %cst_22 : f32 to vector<8x128xf32>
    %64 = arith.maximumf %62, %63 : vector<8x128xf32>
    %c0_23 = arith.constant 0 : index
    %c0_24 = arith.constant 0 : index
    %65 = vector.load %arg6[%c0_23, %c0_24] : memref<128x64xf32, #tpu.memory_space<vmem>>, vector<128x64xf32>
    %cst_25 = arith.constant dense<0.000000e+00> : vector<8x64xf32>
    %66 = tpu.matmul %64, %65, %cst_25 {dimension_numbers = #tpu.dot_dimension_numbers<[1], [0], [0], [1], [0, 0, 1, 1], [], []>} : vector<8x128xf32>, vector<128x64xf32>, vector<8x64xf32> -> vector<8x64xf32>
    %c0_26 = arith.constant 0 : index
    %c0_27 = arith.constant 0 : index
    %67 = vector.load %arg7[%c0_26, %c0_27] : memref<1x64xf32, #tpu.memory_space<vmem>>, vector<1x64xf32>
    %68 = vector.broadcast %67 : vector<1x64xf32> to vector<8x64xf32>
    %69 = arith.addf %66, %68 : vector<8x64xf32>
    %70 = vector.extract_strided_slice %69 {offsets = [0, 0], sizes = [8, 32], strides = [1, 1]} : vector<8x64xf32> to vector<8x32xf32>
    %71 = math.tanh %70 : vector<8x32xf32>
    %72 = vector.extract_strided_slice %69 {offsets = [0, 32], sizes = [8, 32], strides = [1, 1]} : vector<8x64xf32> to vector<8x32xf32>
    %73 = arith.negf %72 : vector<8x32xf32>
    %74 = math.exp %73 : vector<8x32xf32>
    %cst_28 = arith.constant 1.000000e+00 : f32
    %75 = vector.broadcast %cst_28 : f32 to vector<8x32xf32>
    %76 = arith.addf %75, %74 : vector<8x32xf32>
    %77 = arith.divf %75, %76 : vector<8x32xf32>
    %78 = vector.extract_strided_slice %71 {offsets = [0, 0], sizes = [4, 32], strides = [1, 1]} : vector<8x32xf32> to vector<4x32xf32>
    %79 = vector.extract_strided_slice %77 {offsets = [0, 0], sizes = [4, 32], strides = [1, 1]} : vector<8x32xf32> to vector<4x32xf32>
    %cst_29 = arith.constant dense<0xFF800000> : vector<32xf32>
    %80 = vector.multi_reduction <maximumf>, %78, %cst_29 [0] : vector<4x32xf32> to vector<32xf32>
    %81 = vector.shape_cast %80 : vector<32xf32> to vector<1x32xf32>
    %82 = vector.broadcast %81 : vector<1x32xf32> to vector<4x32xf32>
    %83 = arith.subf %78, %82 : vector<4x32xf32>
    %84 = math.exp %83 : vector<4x32xf32>
    %cst_30 = arith.constant dense<0.000000e+00> : vector<32xf32>
    %85 = vector.multi_reduction <add>, %84, %cst_30 [0] : vector<4x32xf32> to vector<32xf32>
    %86 = vector.shape_cast %85 : vector<32xf32> to vector<1x32xf32>
    %87 = tpu.reciprocal %86 {approx = true} : vector<1x32xf32> -> vector<1x32xf32>
    %88 = vector.broadcast %87 : vector<1x32xf32> to vector<4x32xf32>
    %89 = arith.mulf %84, %88 : vector<4x32xf32>
    %90 = arith.mulf %89, %79 : vector<4x32xf32>
    %cst_31 = arith.constant dense<0.000000e+00> : vector<32xf32>
    %91 = vector.multi_reduction <add>, %90, %cst_31 [0] : vector<4x32xf32> to vector<32xf32>
    %92 = vector.shape_cast %91 : vector<32xf32> to vector<1x32xf32>
    %cst_32 = arith.constant dense<0xFF800000> : vector<32xf32>
    %93 = vector.multi_reduction <maximumf>, %79, %cst_32 [0] : vector<4x32xf32> to vector<32xf32>
    %94 = vector.shape_cast %93 : vector<32xf32> to vector<1x32xf32>
    %95 = arith.addf %92, %94 : vector<1x32xf32>
    %cst_33 = arith.constant 5.000000e-01 : f32
    %96 = vector.broadcast %cst_33 : f32 to vector<1x32xf32>
    %97 = arith.mulf %96, %95 : vector<1x32xf32>
    %98 = vector.extract_strided_slice %97 {offsets = [0, 0], sizes = [1, 16], strides = [1, 1]} : vector<1x32xf32> to vector<1x16xf32>
    %cst_34 = arith.constant 3.000000e-01 : f32
    %99 = vector.broadcast %cst_34 : f32 to vector<1x16xf32>
    %100 = arith.mulf %99, %98 : vector<1x16xf32>
    %101 = vector.extract_strided_slice %97 {offsets = [0, 16], sizes = [1, 16], strides = [1, 1]} : vector<1x32xf32> to vector<1x16xf32>
    %cst_35 = arith.constant 0.699999988 : f32
    %102 = vector.broadcast %cst_35 : f32 to vector<1x16xf32>
    %103 = arith.mulf %102, %101 : vector<1x16xf32>
    %104 = arith.addf %100, %103 : vector<1x16xf32>
    %105 = vector.extract_strided_slice %71 {offsets = [4, 0], sizes = [4, 32], strides = [1, 1]} : vector<8x32xf32> to vector<4x32xf32>
    %106 = vector.extract_strided_slice %77 {offsets = [4, 0], sizes = [4, 32], strides = [1, 1]} : vector<8x32xf32> to vector<4x32xf32>
    %cst_36 = arith.constant dense<0xFF800000> : vector<32xf32>
    %107 = vector.multi_reduction <maximumf>, %105, %cst_36 [0] : vector<4x32xf32> to vector<32xf32>
    %108 = vector.shape_cast %107 : vector<32xf32> to vector<1x32xf32>
    %109 = vector.broadcast %108 : vector<1x32xf32> to vector<4x32xf32>
    %110 = arith.subf %105, %109 : vector<4x32xf32>
    %111 = math.exp %110 : vector<4x32xf32>
    %cst_37 = arith.constant dense<0.000000e+00> : vector<32xf32>
    %112 = vector.multi_reduction <add>, %111, %cst_37 [0] : vector<4x32xf32> to vector<32xf32>
    %113 = vector.shape_cast %112 : vector<32xf32> to vector<1x32xf32>
    %114 = tpu.reciprocal %113 {approx = true} : vector<1x32xf32> -> vector<1x32xf32>
    %115 = vector.broadcast %114 : vector<1x32xf32> to vector<4x32xf32>
    %116 = arith.mulf %111, %115 : vector<4x32xf32>
    %117 = arith.mulf %116, %106 : vector<4x32xf32>
    %cst_38 = arith.constant dense<0.000000e+00> : vector<32xf32>
    %118 = vector.multi_reduction <add>, %117, %cst_38 [0] : vector<4x32xf32> to vector<32xf32>
    %119 = vector.shape_cast %118 : vector<32xf32> to vector<1x32xf32>
    %cst_39 = arith.constant dense<0xFF800000> : vector<32xf32>
    %120 = vector.multi_reduction <maximumf>, %106, %cst_39 [0] : vector<4x32xf32> to vector<32xf32>
    %121 = vector.shape_cast %120 : vector<32xf32> to vector<1x32xf32>
    %122 = arith.addf %119, %121 : vector<1x32xf32>
    %cst_40 = arith.constant 5.000000e-01 : f32
    %123 = vector.broadcast %cst_40 : f32 to vector<1x32xf32>
    %124 = arith.mulf %123, %122 : vector<1x32xf32>
    %125 = vector.extract_strided_slice %124 {offsets = [0, 0], sizes = [1, 16], strides = [1, 1]} : vector<1x32xf32> to vector<1x16xf32>
    %cst_41 = arith.constant 3.000000e-01 : f32
    %126 = vector.broadcast %cst_41 : f32 to vector<1x16xf32>
    %127 = arith.mulf %126, %125 : vector<1x16xf32>
    %128 = vector.extract_strided_slice %124 {offsets = [0, 16], sizes = [1, 16], strides = [1, 1]} : vector<1x32xf32> to vector<1x16xf32>
    %cst_42 = arith.constant 0.699999988 : f32
    %129 = vector.broadcast %cst_42 : f32 to vector<1x16xf32>
    %130 = arith.mulf %129, %128 : vector<1x16xf32>
    %131 = arith.addf %127, %130 : vector<1x16xf32>
    %132 = tpu.concatenate %104, %131 in 0 : vector<1x16xf32>, vector<1x16xf32> -> vector<2x16xf32>
    %c0_43 = arith.constant 0 : index
    %c0_44 = arith.constant 0 : index
    %133 = vector.load %arg8[%c0_43, %c0_44] : memref<2x16xf32, #tpu.memory_space<vmem>>, vector<2x16xf32>
    tpu.vector_store %arg8[%c0_43, %c0_44], %132 {strides = array<i32>} : memref<2x16xf32, #tpu.memory_space<vmem>>, vector<2x16xf32>,
    return
  }
  func.func @transform_0(%arg0: i32) -> (i32, i32) {
    %c0_i32 = arith.constant 0 : i32
    %c0_i32_0 = arith.constant 0 : i32
    %c0_i32_1 = arith.constant 0 : i32
    return %c0_i32, %c0_i32_0 : i32, i32
  }
  func.func @transform_1(%arg0: i32) -> (i32, i32) {
    %c0_i32 = arith.constant 0 : i32
    %c0_i32_0 = arith.constant 0 : i32
    %c0_i32_1 = arith.constant 0 : i32
    return %c0_i32, %c0_i32_0 : i32, i32
  }
  func.func @transform_2(%arg0: i32) -> (i32, i32) {
    %c0_i32 = arith.constant 0 : i32
    %c0_i32_0 = arith.constant 0 : i32
    %c0_i32_1 = arith.constant 0 : i32
    return %c0_i32, %c0_i32_0 : i32, i32
  }
  func.func @transform_3(%arg0: i32) -> (i32, i32) {
    %c0_i32 = arith.constant 0 : i32
    %c0_i32_0 = arith.constant 0 : i32
    %c0_i32_1 = arith.constant 0 : i32
    return %c0_i32, %c0_i32_0 : i32, i32
  }
  func.func @transform_4(%arg0: i32) -> (i32, i32) {
    %c0_i32 = arith.constant 0 : i32
    %c0_i32_0 = arith.constant 0 : i32
    %c0_i32_1 = arith.constant 0 : i32
    return %c0_i32, %c0_i32_0 : i32, i32
  }
  func.func @transform_5(%arg0: i32) -> (i32, i32) {
    %c0_i32 = arith.constant 0 : i32
    %c0_i32_0 = arith.constant 0 : i32
    %c0_i32_1 = arith.constant 0 : i32
    return %c0_i32, %c0_i32_0 : i32, i32
  }
  func.func @transform_6(%arg0: i32) -> (i32, i32) {
    %c0_i32 = arith.constant 0 : i32
    %c0_i32_0 = arith.constant 0 : i32
    %c0_i32_1 = arith.constant 0 : i32
    return %c0_i32, %c0_i32_0 : i32, i32
  }
  func.func @transform_7(%arg0: i32) -> (i32, i32) {
    %c0_i32 = arith.constant 0 : i32
    %c0_i32_0 = arith.constant 0 : i32
    %c0_i32_1 = arith.constant 0 : i32
    return %c0_i32, %c0_i32_0 : i32, i32
  }
}

</mosaic_0001>

<llo_original>
// kernel: _lambda_.1
$region0: #{_lambda_.1}
  #allocation0 [shape = 'u32[]', space=smem, size = 0x4, offset = 0x4, fixed_abs, tag = 'smem constant byte address 0x4 - core index']
  #allocation1 [shape = 'u32[144,128]{1,0:T(1,128)}', space=vmem, size = 0x12000, scoped, tag = 'internal scratch']
  %s0 = inlined_call_operand.vmem [shape: f32[32,16], index: 0, kind: input, shape index: {}]
  %s1 = inlined_call_operand.vmem [shape: f32[16,128], index: 1, kind: input, shape index: {}]
  %s2 = inlined_call_operand.vmem [shape: f32[1,128], index: 2, kind: input, shape index: {}, may-alias: {2,4}]
  %s3 = inlined_call_operand.vmem [shape: f32[128,128], index: 3, kind: input, shape index: {}]
  %s4 = inlined_call_operand.vmem [shape: f32[1,128], index: 4, kind: input, shape index: {}, may-alias: {2,4}]
  %s5 = inlined_call_operand.vmem [shape: f32[128,64], index: 5, kind: input, shape index: {}]
  %s6 = inlined_call_operand.vmem [shape: f32[1,64], index: 6, kind: input, shape index: {}]
  %s7 = inlined_call_operand.vmem [shape: f32[2,16], index: 7, kind: output, shape index: {}]
  %s8 = sld [smem:[#allocation0]]
  $region38: #{_lambda_.1} parent=0
    _
  %s10 = ssub.s32 1, %s8
  %s11 = scalar_select 0, %s10, %s8
  // Predicated region
  $region2: #{_lambda_.1} parent=0 // pred_check
    _
  $region3: #{_lambda_.1} parent=0 // pred_check_branch
    %13 = sbr.rel (0) target = $region5
  $region4: #{_lambda_.1} parent=0 // pred_region
    _
  $region5: #{_lambda_.1} parent=0 // pred_fallthru
    _
  // Predicated region
  $region6: #{_lambda_.1} parent=0 // pred_check
    _
  $region7: #{_lambda_.1} parent=0 // pred_check_branch
    %15 = sbr.rel (0) target = $region9
  $region8: #{_lambda_.1} parent=0 // pred_region
    _
  $region9: #{_lambda_.1} parent=0 // pred_fallthru
    _
  // Predicated region
  $region10: #{_lambda_.1} parent=0 // pred_check
    _
  $region11: #{_lambda_.1} parent=0 // pred_check_branch
    %17 = sbr.rel (0) target = $region13
  $region12: #{_lambda_.1} parent=0 // pred_region
    _
  $region13: #{_lambda_.1} parent=0 // pred_fallthru
    _
  // Predicated region
  $region14: #{_lambda_.1} parent=0 // pred_check
    _
  $region15: #{_lambda_.1} parent=0 // pred_check_branch
    %19 = sbr.rel (0) target = $region17
  $region16: #{_lambda_.1} parent=0 // pred_region
    _
  $region17: #{_lambda_.1} parent=0 // pred_fallthru
    _
  // Predicated region
  $region18: #{_lambda_.1} parent=0 // pred_check
    _
  $region19: #{_lambda_.1} parent=0 // pred_check_branch
    %21 = sbr.rel (0) target = $region21
  $region20: #{_lambda_.1} parent=0 // pred_region
    _
  $region21: #{_lambda_.1} parent=0 // pred_fallthru
    _
  // Predicated region
  $region22: #{_lambda_.1} parent=0 // pred_check
    _
  $region23: #{_lambda_.1} parent=0 // pred_check_branch
    %23 = sbr.rel (0) target = $region25
  $region24: #{_lambda_.1} parent=0 // pred_region
    _
  $region25: #{_lambda_.1} parent=0 // pred_fallthru
    _
  // Predicated region
  $region26: #{_lambda_.1} parent=0 // pred_check
    _
  $region27: #{_lambda_.1} parent=0 // pred_check_branch
    %25 = sbr.rel (0) target = $region29
  $region28: #{_lambda_.1} parent=0 // pred_region
    _
  $region29: #{_lambda_.1} parent=0 // pred_fallthru
    _
  %v26 = vld [vmem:[%s0] sm:$0xff]
  %v27 = vld [vmem:[%s0 + $0x8] sm:$0xff]
  %v28 = vld [vmem:[%s0 + $0x10] sm:$0xff]
  %v29 = vld [vmem:[%s0 + $0x18] sm:$0xff]
  %v30 = vld [vmem:[%s1] sm:$0xff]
  %v31 = vld [vmem:[%s1 + $0x8] sm:$0xff]
  %v32 = vld [vmem:[%s2] sm:$0x1]
  %v34 = vlaneseq
  %v35 = vshrl.u32 %v34, 7
  %v36 = vsub.s32 0, %v35
  %v37 = vrot.slane %v32, %v36
  %vm39 = vcmask 130048
  %v41 = vsel %vm39, %v26, 0
  %v44 = vsel %vm39, %v27, 0
  %v47 = vsel %vm39, %v28, 0
  %v50 = vsel %vm39, %v29, 0
  %52 = vmatprep.subr.mxu0 0.0
  %53 = vmatpush1.msra.mxu0 0.0
  %54 = vmatprep.subr.mxu0 0.0
  %55 = vmatpush1.msra.mxu0 0.0
  %56 = vmatprep.subr.mxu0 0.0
  %57 = vmatpush1.msra.mxu0 0.0
  %58 = vmatprep.subr.mxu0 0.0
  %59 = vmatpush1.msra.mxu0 0.0
  %60 = vmatprep.subr.mxu0 0.0
  %61 = vmatpush1.msra.mxu0 0.0
  %62 = vmatprep.subr.mxu0 0.0
  %63 = vmatpush1.msra.mxu0 0.0
  %64 = vmatprep.subr.mxu0 0.0
  %65 = vmatpush1.msra.mxu0 0.0
  %66 = vmatprep.subr.mxu0 0.0
  %67 = vmatpush1.msra.mxu0 0.0
  %68 = vmatprep.subr.mxu0 0.0
  %69 = vmatpush1.msra.mxu0 0.0
  %70 = vmatprep.subr.mxu0 0.0
  %71 = vmatpush1.msra.mxu0 0.0
  %72 = vmatprep.subr.mxu0 0.0
  %73 = vmatpush1.msra.mxu0 0.0
  %74 = vmatprep.subr.mxu0 0.0
  %75 = vmatpush1.msra.mxu0 0.0
  %76 = vmatprep.subr.mxu0 0.0
  %77 = vmatpush1.msra.mxu0 0.0
  %78 = vmatprep.subr.mxu0 0.0
  %79 = vmatpush1.msra.mxu0 0.0
  %80 = vmatprep.subr.mxu0 0.0
  %81 = vmatpush1.msra.mxu0 %v31
  %82 = vmatprep.subr.mxu0 0.0
  %83 = vmatpush1.msra.mxu0 %v30
  %84 = vmatprep.subr.mxu0 0.0
  %85 = vmatpush2.msra.mxu0 0.0
  %86 = vmatprep.subr.mxu0 0.0
  %87 = vmatpush2.msra.mxu0 0.0
  %88 = vmatprep.subr.mxu0 0.0
  %89 = vmatpush2.msra.mxu0 0.0
  %90 = vmatprep.subr.mxu0 0.0
  %91 = vmatpush2.msra.mxu0 0.0
  %92 = vmatprep.subr.mxu0 0.0
  %93 = vmatpush2.msra.mxu0 0.0
  %94 = vmatprep.subr.mxu0 0.0
  %95 = vmatpush2.msra.mxu0 0.0
  %96 = vmatprep.subr.mxu0 0.0
  %97 = vmatpush2.msra.mxu0 0.0
  %98 = vmatprep.subr.mxu0 0.0
  %99 = vmatpush2.msra.mxu0 0.0
  %100 = vmatprep.subr.mxu0 0.0
  %101 = vmatpush2.msra.mxu0 0.0
  %102 = vmatprep.subr.mxu0 0.0
  %103 = vmatpush2.msra.mxu0 0.0
  %104 = vmatprep.subr.mxu0 0.0
  %105 = vmatpush2.msra.mxu0 0.0
  %106 = vmatprep.subr.mxu0 0.0
  %107 = vmatpush2.msra.mxu0 0.0
  %108 = vmatprep.subr.mxu0 0.0
  %109 = vmatpush2.msra.mxu0 0.0
  %110 = vmatprep.subr.mxu0 0.0
  %111 = vmatpush2.msra.mxu0 0.0
  %112 = vmatprep.subr.mxu0 0.0
  %113 = vmatpush2.msra.mxu0 0.0
  %114 = vmatprep.subr.mxu0 0.0
  %115 = vmatpush2.msra.mxu0 0.0
  %116 = vmatprep.mubr.f32.mxu0 0.0
  %117 = vmatmul.mubr.f32.gmra.mxu0 %v41
  %v118 = vpop.f32.mrf.mxu0
  %v119 = vadd.f32 %v37, %v118
  %v120 = vpop.f32.mrf.mxu0
  %121 = vmatprep.mubr.f32.mxu0 0.0
  %122 = vmatmul.mubr.f32.gmra.mxu0 %v44
  %v123 = vpop.f32.mrf.mxu0
  %v124 = vadd.f32 %v37, %v123
  %v125 = vpop.f32.mrf.mxu0
  %126 = vmatprep.mubr.f32.mxu0 0.0
  %127 = vmatmul.mubr.f32.gmra.mxu0 %v47
  %v128 = vpop.f32.mrf.mxu0
  %v129 = vadd.f32 %v37, %v128
  %v130 = vpop.f32.mrf.mxu0
  %131 = vmatprep.mubr.f32.mxu0 0.0
  %132 = vmatmul.mubr.f32.gmra.mxu0 %v50
  %v133 = vpop.f32.mrf.mxu0
  %v134 = vadd.f32 %v37, %v133
  %v135 = vpop.f32.mrf.mxu0
  %136 = vdwg.mxu0
  %v137 = vmax.f32 %v119, 0.0
  %v138 = vmax.f32 %v124, 0.0
  %v139 = vmax.f32 %v129, 0.0
  %v140 = vmax.f32 %v134, 0.0
  %v141 = vadd.f32 %v137, %v138
  %v142 = vadd.f32 %v141, %v139
  %v143 = vadd.f32 %v142, %v140
  %v144 = vmul.f32 %v143, 0.25
  %v146 = vrot.slane %v144, 7
  %vm148 = vcmask 1040384
  %v149 = vsel %vm148, 0.0, %v146
  %v150 = vrot.slane %v144, 1
  %vm152 = vcmask 1046528
  %v153 = vsel %vm152, %v150, 0.0
  %v154 = vlaneseq
  %v155 = vshrl.u32 %v154, 7
  %vm156 = vcmp.lt.s32.totalorder %v155, 0
  %v157 = vsub.s32 0, %v155
  %v158 = vsel %vm156, %v157, %v155
  %v159 = vshrl.u32 %v158, 2
  %v160 = vand.u32 %v158, 3
  %v161 = vsub.s32 0, %v160
  %v162 = vsel %vm156, %v161, %v160
  %vm163 = vcmp.ne.s32.totalorder %v162, 0
  %vm164 = vcmp.lt.s32.totalorder %v162, 0
  %vm165 = vmand %vm164, %vm163
  %v166 = vadd.s32 %v162, 4
  %v167 = vsel %vm165, %v166, %v162
  %vm168 = vcmp.eq.s32.totalorder %v167, 0
  %vm169 = vcmp.eq.s32.totalorder %v167, 3
  %v170 = vsel %vm168, -inf, %v149
  %v171 = vsel %vm169, -inf, %v153
  %v172 = vmax.f32 %v170, %v171
  %v173 = vmax.f32 %v144, %v172
  %v174 = vsel %vm168, 0.0, %v149
  %v175 = vadd.f32 %v144, %v174
  %v176 = vsel %vm169, 0.0, %v153
  %v177 = vadd.f32 %v175, %v176
  %v178 = vmul.f32 %v177, 0.33333334
  %v179 = vadd.f32 %v173, %v178
  %v180 = vld [vmem:[%s3] sm:$0xff]
  %v181 = vld [vmem:[%s3 + $0x8] sm:$0xff]
  %v182 = vld [vmem:[%s3 + $0x10] sm:$0xff]
  %v183 = vld [vmem:[%s3 + $0x18] sm:$0xff]
  %v184 = vld [vmem:[%s3 + $0x20] sm:$0xff]
  %v185 = vld [vmem:[%s3 + $0x28] sm:$0xff]
  %v186 = vld [vmem:[%s3 + $0x30] sm:$0xff]
  %v187 = vld [vmem:[%s3 + $0x38] sm:$0xff]
  %v188 = vld [vmem:[%s3 + $0x40] sm:$0xff]
  %v189 = vld [vmem:[%s3 + $0x48] sm:$0xff]
  %v190 = vld [vmem:[%s3 + $0x50] sm:$0xff]
  %v191 = vld [vmem:[%s3 + $0x58] sm:$0xff]
  %v192 = vld [vmem:[%s3 + $0x60] sm:$0xff]
  %v193 = vld [vmem:[%s3 + $0x68] sm:$0xff]
  %v194 = vld [vmem:[%s3 + $0x70] sm:$0xff]
  %v195 = vld [vmem:[%s3 + $0x78] sm:$0xff]
  %v196 = vld [vmem:[%s4] sm:$0x1]
  %v198 = vlaneseq
  %v199 = vshrl.u32 %v198, 7
  %v200 = vsub.s32 0, %v199
  %v201 = vrot.slane %v196, %v200
  %203 = vmatprep.subr.mxu0 0.0
  %204 = vmatpush1.msra.mxu0 %v195
  %205 = vmatprep.subr.mxu0 0.0
  %206 = vmatpush1.msra.mxu0 %v194
  %207 = vmatprep.subr.mxu0 0.0
  %208 = vmatpush1.msra.mxu0 %v193
  %209 = vmatprep.subr.mxu0 0.0
  %210 = vmatpush1.msra.mxu0 %v192
  %211 = vmatprep.subr.mxu0 0.0
  %212 = vmatpush1.msra.mxu0 %v191
  %213 = vmatprep.subr.mxu0 0.0
  %214 = vmatpush1.msra.mxu0 %v190
  %215 = vmatprep.subr.mxu0 0.0
  %216 = vmatpush1.msra.mxu0 %v189
  %217 = vmatprep.subr.mxu0 0.0
  %218 = vmatpush1.msra.mxu0 %v188
  %219 = vmatprep.subr.mxu0 0.0
  %220 = vmatpush1.msra.mxu0 %v187
  %221 = vmatprep.subr.mxu0 0.0
  %222 = vmatpush1.msra.mxu0 %v186
  %223 = vmatprep.subr.mxu0 0.0
  %224 = vmatpush1.msra.mxu0 %v185
  %225 = vmatprep.subr.mxu0 0.0
  %226 = vmatpush1.msra.mxu0 %v184
  %227 = vmatprep.subr.mxu0 0.0
  %228 = vmatpush1.msra.mxu0 %v183
  %229 = vmatprep.subr.mxu0 0.0
  %230 = vmatpush1.msra.mxu0 %v182
  %231 = vmatprep.subr.mxu0 0.0
  %232 = vmatpush1.msra.mxu0 %v181
  %233 = vmatprep.subr.mxu0 0.0
  %234 = vmatpush1.msra.mxu0 %v180
  %235 = vmatprep.subr.mxu0 0.0
  %236 = vmatpush2.msra.mxu0 0.0
  %237 = vmatprep.subr.mxu0 0.0
  %238 = vmatpush2.msra.mxu0 0.0
  %239 = vmatprep.subr.mxu0 0.0
  %240 = vmatpush2.msra.mxu0 0.0
  %241 = vmatprep.subr.mxu0 0.0
  %242 = vmatpush2.msra.mxu0 0.0
  %243 = vmatprep.subr.mxu0 0.0
  %244 = vmatpush2.msra.mxu0 0.0
  %245 = vmatprep.subr.mxu0 0.0
  %246 = vmatpush2.msra.mxu0 0.0
  %247 = vmatprep.subr.mxu0 0.0
  %248 = vmatpush2.msra.mxu0 0.0
  %249 = vmatprep.subr.mxu0 0.0
  %250 = vmatpush2.msra.mxu0 0.0
  %251 = vmatprep.subr.mxu0 0.0
  %252 = vmatpush2.msra.mxu0 0.0
  %253 = vmatprep.subr.mxu0 0.0
  %254 = vmatpush2.msra.mxu0 0.0
  %255 = vmatprep.subr.mxu0 0.0
  %256 = vmatpush2.msra.mxu0 0.0
  %257 = vmatprep.subr.mxu0 0.0
  %258 = vmatpush2.msra.mxu0 0.0
  %259 = vmatprep.subr.mxu0 0.0
  %260 = vmatpush2.msra.mxu0 0.0
  %261 = vmatprep.subr.mxu0 0.0
  %262 = vmatpush2.msra.mxu0 0.0
  %263 = vmatprep.subr.mxu0 0.0
  %264 = vmatpush2.msra.mxu0 0.0
  %265 = vmatprep.subr.mxu0 0.0
  %266 = vmatpush2.msra.mxu0 0.0
  %267 = vmatprep.mubr.f32.mxu0 0.0
  %268 = vmatmul.mubr.f32.gmra.mxu0 %v179
  %v269 = vpop.f32.mrf.mxu0
  %v270 = vadd.f32 %v201, %v269
  %v271 = vpop.f32.mrf.mxu0
  %272 = vdwg.mxu0
  %v273 = vmax.f32 %v270, 0.0
  %v274 = vld [vmem:[%s5] sm:$0xff]
  %v275 = vld [vmem:[%s5 + $0x8] sm:$0xff]
  %v276 = vld [vmem:[%s5 + $0x10] sm:$0xff]
  %v277 = vld [vmem:[%s5 + $0x18] sm:$0xff]
  %v278 = vld [vmem:[%s5 + $0x20] sm:$0xff]
  %v279 = vld [vmem:[%s5 + $0x28] sm:$0xff]
  %v280 = vld [vmem:[%s5 + $0x30] sm:$0xff]
  %v281 = vld [vmem:[%s5 + $0x38] sm:$0xff]
  %v282 = vld [vmem:[%s5 + $0x40] sm:$0xff]
  %v283 = vld [vmem:[%s5 + $0x48] sm:$0xff]
  %v284 = vld [vmem:[%s5 + $0x50] sm:$0xff]
  %v285 = vld [vmem:[%s5 + $0x58] sm:$0xff]
  %v286 = vld [vmem:[%s5 + $0x60] sm:$0xff]
  %v287 = vld [vmem:[%s5 + $0x68] sm:$0xff]
  %v288 = vld [vmem:[%s5 + $0x70] sm:$0xff]
  %v289 = vld [vmem:[%s5 + $0x78] sm:$0xff]
  %v290 = vld [vmem:[%s6] sm:$0x1]
  %v292 = vlaneseq
  %v293 = vshrl.u32 %v292, 7
  %v294 = vsub.s32 0, %v293
  %v295 = vrot.slane %v290, %v294
  %297 = vmatprep.subr.mxu0 0.0
  %298 = vmatpush1.msra.mxu0 %v289
  %299 = vmatprep.subr.mxu0 0.0
  %300 = vmatpush1.msra.mxu0 %v288
  %301 = vmatprep.subr.mxu0 0.0
  %302 = vmatpush1.msra.mxu0 %v287
  %303 = vmatprep.subr.mxu0 0.0
  %304 = vmatpush1.msra.mxu0 %v286
  %305 = vmatprep.subr.mxu0 0.0
  %306 = vmatpush1.msra.mxu0 %v285
  %307 = vmatprep.subr.mxu0 0.0
  %308 = vmatpush1.msra.mxu0 %v284
  %309 = vmatprep.subr.mxu0 0.0
  %310 = vmatpush1.msra.mxu0 %v283
  %311 = vmatprep.subr.mxu0 0.0
  %312 = vmatpush1.msra.mxu0 %v282
  %313 = vmatprep.subr.mxu0 0.0
  %314 = vmatpush1.msra.mxu0 %v281
  %315 = vmatprep.subr.mxu0 0.0
  %316 = vmatpush1.msra.mxu0 %v280
  %317 = vmatprep.subr.mxu0 0.0
  %318 = vmatpush1.msra.mxu0 %v279
  %319 = vmatprep.subr.mxu0 0.0
  %320 = vmatpush1.msra.mxu0 %v278
  %321 = vmatprep.subr.mxu0 0.0
  %322 = vmatpush1.msra.mxu0 %v277
  %323 = vmatprep.subr.mxu0 0.0
  %324 = vmatpush1.msra.mxu0 %v276
  %325 = vmatprep.subr.mxu0 0.0
  %326 = vmatpush1.msra.mxu0 %v275
  %327 = vmatprep.subr.mxu0 0.0
  %328 = vmatpush1.msra.mxu0 %v274
  %329 = vmatprep.subr.mxu0 0.0
  %330 = vmatpush2.msra.mxu0 0.0
  %331 = vmatprep.subr.mxu0 0.0
  %332 = vmatpush2.msra.mxu0 0.0
  %333 = vmatprep.subr.mxu0 0.0
  %334 = vmatpush2.msra.mxu0 0.0
  %335 = vmatprep.subr.mxu0 0.0
  %336 = vmatpush2.msra.mxu0 0.0
  %337 = vmatprep.subr.mxu0 0.0
  %338 = vmatpush2.msra.mxu0 0.0
  %339 = vmatprep.subr.mxu0 0.0
  %340 = vmatpush2.msra.mxu0 0.0
  %341 = vmatprep.subr.mxu0 0.0
  %342 = vmatpush2.msra.mxu0 0.0
  %343 = vmatprep.subr.mxu0 0.0
  %344 = vmatpush2.msra.mxu0 0.0
  %345 = vmatprep.subr.mxu0 0.0
  %346 = vmatpush2.msra.mxu0 0.0
  %347 = vmatprep.subr.mxu0 0.0
  %348 = vmatpush2.msra.mxu0 0.0
  %349 = vmatprep.subr.mxu0 0.0
  %350 = vmatpush2.msra.mxu0 0.0
  %351 = vmatprep.subr.mxu0 0.0
  %352 = vmatpush2.msra.mxu0 0.0
  %353 = vmatprep.subr.mxu0 0.0
  %354 = vmatpush2.msra.mxu0 0.0
  %355 = vmatprep.subr.mxu0 0.0
  %356 = vmatpush2.msra.mxu0 0.0
  %357 = vmatprep.subr.mxu0 0.0
  %358 = vmatpush2.msra.mxu0 0.0
  %359 = vmatprep.subr.mxu0 0.0
  %360 = vmatpush2.msra.mxu0 0.0
  %361 = vmatprep.mubr.f32.mxu0 0.0
  %362 = vmatmul.mubr.f32.gmra.mxu0 %v273
  %v363 = vpop.f32.mrf.mxu0
  %v364 = vadd.f32 %v295, %v363
  %v365 = vpop.f32.mrf.mxu0
  %366 = vdwg.mxu0
  %v367 = vtanh.pop %v364
  %v368 = vxor.u32 %v364, 2147483648
  %v369 = vmul.f32 %v368, 1.442695
  %v370 = vpow.pop %v369
  %v371 = vadd.f32 %v370, 1.0
  %v372 = vrcp.pop %v371
  %v373 = vmul.f32 1.0, %v372
  %vm374 = vcmask 257024
  %v375 = vsel %vm374, %v367, -inf
  %v376 = vrot.slane %v375, 4
  %v377 = vmax.f32 %v375, %v376
  %v378 = vrot.slane %v377, 2
  %v379 = vmax.f32 %v377, %v378
  %v380 = vrot.slane %v379, 1
  %v381 = vmax.f32 %v379, %v380
  %v382 = vsub.f32 %v367, %v381
  %v383 = vmul.f32 %v382, 1.442695
  %v384 = vpow.pop %v383
  %v385 = vsel %vm374, %v384, 0.0
  %v386 = vrot.slane %v385, 4
  %v387 = vadd.f32 %v385, %v386
  %v388 = vrot.slane %v387, 2
  %v389 = vadd.f32 %v387, %v388
  %v390 = vrot.slane %v389, 1
  %v391 = vadd.f32 %v389, %v390
  %v392 = vrcp.pop %v391
  %v393 = vmul.f32 %v384, %v392
  %395 = vrot.lane.b32.xlu0 %v373, 96
  %v396 = vpop.permute.xlu0 %395
  %v398 = vmul.f32 %v393, %v396
  %v399 = vsel %vm374, %v398, 0.0
  %v400 = vrot.slane %v399, 4
  %v401 = vadd.f32 %v399, %v400
  %v402 = vrot.slane %v401, 2
  %v403 = vadd.f32 %v401, %v402
  %v404 = vrot.slane %v403, 1
  %v405 = vadd.f32 %v403, %v404
  %vm406 = vcmask 519424
  %v407 = vsel %vm406, %v373, -inf
  %v408 = vrot.slane %v407, 4
  %v409 = vmax.f32 %v407, %v408
  %v410 = vrot.slane %v409, 2
  %v411 = vmax.f32 %v409, %v410
  %v412 = vrot.slane %v411, 1
  %v413 = vmax.f32 %v411, %v412
  %415 = vrot.lane.b32.xlu0 %v413, 96
  %v416 = vpop.permute.xlu0 %415
  %v418 = vadd.f32 %v405, %v416
  %v419 = vmul.f32 %v418, 0.5
  %v420 = vmul.f32 %v419, 0.3
  %v421 = vmul.f32 %v419, 0.7
  %423 = vrot.lane.b32.xlu0 %v421, 112
  %v424 = vpop.permute.xlu0 %423
  %v426 = vadd.f32 %v420, %v424
  %vm427 = vcmask 261124
  %v428 = vsel %vm427, %v367, -inf
  %v429 = vrot.slane %v428, 4
  %v430 = vmax.f32 %v428, %v429
  %v431 = vrot.slane %v430, 2
  %v432 = vmax.f32 %v430, %v431
  %v433 = vrot.slane %v432, 1
  %v434 = vmax.f32 %v432, %v433
  %v435 = vsub.f32 %v367, %v434
  %v436 = vmul.f32 %v435, 1.442695
  %v437 = vpow.pop %v436
  %v439 = vrot.slane %v437, 4
  %v441 = vsel %vm374, %v439, 0.0
  %v442 = vrot.slane %v441, 4
  %v443 = vadd.f32 %v441, %v442
  %v444 = vrot.slane %v443, 2
  %v445 = vadd.f32 %v443, %v444
  %v446 = vrot.slane %v445, 1
  %v447 = vadd.f32 %v445, %v446
  %v448 = vrcp.pop %v447
  %v449 = vmul.f32 %v437, %v448
  %v450 = vmul.f32 %v449, %v396
  %v452 = vrot.slane %v450, 4
  %v454 = vsel %vm374, %v452, 0.0
  %v455 = vrot.slane %v454, 4
  %v456 = vadd.f32 %v454, %v455
  %v457 = vrot.slane %v456, 2
  %v458 = vadd.f32 %v456, %v457
  %v459 = vrot.slane %v458, 1
  %v460 = vadd.f32 %v458, %v459
  %vm461 = vcmask 523524
  %v462 = vsel %vm461, %v373, -inf
  %v463 = vrot.slane %v462, 4
  %v464 = vmax.f32 %v462, %v463
  %v465 = vrot.slane %v464, 2
  %v466 = vmax.f32 %v464, %v465
  %v467 = vrot.slane %v466, 1
  %v468 = vmax.f32 %v466, %v467
  %470 = vrot.lane.b32.xlu0 %v468, 96
  %v471 = vpop.permute.xlu0 %470
  %v473 = vadd.f32 %v460, %v471
  %v474 = vmul.f32 %v473, 0.5
  %v475 = vmul.f32 %v474, 0.3
  %v476 = vmul.f32 %v474, 0.7
  %478 = vrot.lane.b32.xlu0 %v476, 112
  %v479 = vpop.permute.xlu0 %478
  %v481 = vadd.f32 %v475, %v479
  %v483 = vrot.slane %v481, 7
  %v485 = vsel %vm148, %v426, %v483
  %vm486 = vcmask 123904
  %487 = vst.msk [vmem:[%s7] sm:$0x3] %vm486, %v485
  // Predicated region
  $region30: #{_lambda_.1} parent=0 // pred_check
    _
  $region31: #{_lambda_.1} parent=0 // pred_check_branch
    %489 = sbr.rel (0) target = $region33
  $region32: #{_lambda_.1} parent=0 // pred_region
    _
  $region33: #{_lambda_.1} parent=0 // pred_fallthru
    _
  // Predicated region
  $region34: #{_lambda_.1} parent=0 // pred_check
    _
  $region35: #{_lambda_.1} parent=0 // pred_check_branch
    %491 = sbr.rel (0) target = $region37
  $region36: #{_lambda_.1} parent=0 // pred_region
    _
  $region37: #{_lambda_.1} parent=0 // pred_fallthru
    _

</llo_original>
